<compile_context>
chip_gen: v7x
topology: tpu7x:2x2x1
jax: 0.10.0
libtpu: 0.0.40
codegen_flags: <defaults>
</compile_context>

<pallas_src>
import jax
import jax.numpy as jnp
import numpy as np
from jax.experimental import pallas as pl
from jax.experimental.pallas import tpu as pltpu

# ---- Synthetic config (the cfg fields the module uses) ----------------------
IN_CHANNELS   = 6
CONV_FEATURES = 10
IM_SIZE       = 64
KERNEL_A      = 3
APPEND        = 24                                   # cfg.data.append  -> T = L_out = 8
CLASSES       = 5                                    # cfg.data.classes
NUM_FC_LAYERS = 3                                    # cfg.model.num_fc_layers
T_OUT         = APPEND // KERNEL_A                   # 8
CONV_OUT_DIM  = T_OUT * CONV_FEATURES                # 80
BATCH         = 4
BN_EPS        = 1e-5

PAD   = 128                                          # lane-dense feature width everywhere
X_DIM = IN_CHANNELS * APPEND                         # 144 (flattened NCL input)

# ---- Row offsets inside the single packed (TOTAL_ROWS, 128) parameter slab ---
W_CONV_OFF = 0                                       # (144, 128) block-structured conv weight
FC1_OFF    = W_CONV_OFF + X_DIM                      # 144  (128, 128)
FC2_OFF    = FC1_OFF + PAD                           # 272  (128, 128)
FC3_OFF    = FC2_OFF + PAD                           # 400  (128, 128)
PVEC_OFF   = FC3_OFF + PAD                           # 528  (16, 128) packed vectors
PVEC_ROWS  = 16
TOTAL_ROWS = PVEC_OFF + PVEC_ROWS                    # 544 (multiple of 8 -> tile aligned)

# Packed-vector rows (relative to PVEC_OFF); each row is a full (128,) lane vector
ROW_BN1_G, ROW_BN1_B = 0, 1
ROW_FC1_B            = 2
ROW_BN2_G, ROW_BN2_B = 3, 4
ROW_FC2_B            = 5
ROW_BN3_G, ROW_BN3_B = 6, 7
ROW_FC3_B            = 8


# ---- Fused Pallas kernel -----------------------------------------------------
def fused_kernel(x_ref, p_ref, out_ref):
    # x_ref:   (B, 144)        flattened NCL input (contiguous reshape only)
    # p_ref:   (544, 128)      all weights + vectors, lane-dense, tile-aligned rows
    # out_ref: (B, 128)        lane-dense output; true logits live in columns [:5]

    # Hoist the nine packed-vector rows once as full (1, 128) unmasked loads.
    def row(r):
        return p_ref[PVEC_OFF + r:PVEC_OFF + r + 1, :]

    bn1_g, bn1_b = row(ROW_BN1_G), row(ROW_BN1_B)
    fc1_b        = row(ROW_FC1_B)
    bn2_g, bn2_b = row(ROW_BN2_G), row(ROW_BN2_B)
    fc2_b        = row(ROW_FC2_B)
    bn3_g, bn3_b = row(ROW_BN3_G), row(ROW_BN3_B)
    fc3_b        = row(ROW_FC3_B)

    # Static, tile-aligned weight slices (zero-cost views of the resident slab).
    w_conv = p_ref[W_CONV_OFF:W_CONV_OFF + X_DIM, :]   # (144, 128)
    fc1_w  = p_ref[FC1_OFF:FC1_OFF + PAD, :]           # (128, 128)
    fc2_w  = p_ref[FC2_OFF:FC2_OFF + PAD, :]           # (128, 128)
    fc3_w  = p_ref[FC3_OFF:FC3_OFF + PAD, :]           # (128, 128)

    def bn_relu(h, g, b):
        # training-mode BatchNorm1d: batch mean, biased batch variance.
        # Padded lanes carry gamma = beta = 0 and h = 0, so they stay exactly 0.
        m = jnp.mean(h, axis=0, keepdims=True)
        d = h - m
        v = jnp.mean(d * d, axis=0, keepdims=True)
        return jnp.maximum(d * jax.lax.rsqrt(v + BN_EPS) * g + b, 0.0)

    # Conv1d(k=3, s=3, pad=0, bias=False) as one matmul; feature order is the
    # pre-permuted (t*C_out + c) order so no runtime transpose is needed.
    feats = jnp.dot(x_ref[...], w_conv, preferred_element_type=jnp.float32)

    h = bn_relu(feats, bn1_g, bn1_b)
    h = jnp.dot(h, fc1_w, preferred_element_type=jnp.float32) + fc1_b
    h = bn_relu(h, bn2_g, bn2_b)
    h = jnp.dot(h, fc2_w, preferred_element_type=jnp.float32) + fc2_b
    h = bn_relu(h, bn3_g, bn3_b)

    out_ref[...] = (jnp.dot(h, fc3_w, preferred_element_type=jnp.float32)
                    + fc3_b).astype(out_ref.dtype)


# ---- Wrapper -----------------------------------------------------------------
@jax.jit
def conv1dnet_forward(x, params_slab):
    B = x.shape[0]
    # Contiguous reshape only (no transpose/copy): x[b, c*L + l] = x[b, c, l]
    x_flat = x.reshape(B, X_DIM)

    # Advisory cost estimate so XLA treats the call as microsecond-scale.
    flops = 2 * B * (X_DIM * PAD + 3 * PAD * PAD) + 6 * B * PAD
    bytes_accessed = 4 * (B * X_DIM + TOTAL_ROWS * PAD + B * PAD)
    transcendentals = 3 * PAD                         # three rsqrt rows

    vmem = pl.BlockSpec(memory_space=pltpu.MemorySpace.VMEM)
    out_padded = pl.pallas_call(
        fused_kernel,
        out_shape=jax.ShapeDtypeStruct((B, PAD), jnp.float32),
        in_specs=[vmem, vmem],
        out_specs=vmem,
        cost_estimate=pl.CostEstimate(flops=flops,
                                      transcendentals=transcendentals,
                                      bytes_accessed=bytes_accessed),
    )(x_flat, params_slab)
    return out_padded[:, :CLASSES]


# ---- PyTorch-layout parameter init (PyTorch-style uniform fan-in bounds) ------
def init_torch_params(key):
    ks = jax.random.split(key, 8)

    def uni(k, fan_in, shape):
        bound = 1.0 / np.sqrt(fan_in)
        return jax.random.uniform(k, shape, jnp.float32, -bound, bound)

    tp = {}
    tp['w_conv'] = uni(ks[0], IN_CHANNELS * KERNEL_A, (CONV_FEATURES, IN_CHANNELS, KERNEL_A))
    tp['bn1_g'] = jnp.ones((CONV_OUT_DIM,), jnp.float32)
    tp['bn1_b'] = jnp.zeros((CONV_OUT_DIM,), jnp.float32)
    tp['fc1_w'] = uni(ks[1], CONV_OUT_DIM, (IM_SIZE, CONV_OUT_DIM))     # PyTorch (out, in)
    tp['fc1_b'] = uni(ks[2], CONV_OUT_DIM, (IM_SIZE,))
    tp['bn2_g'] = jnp.ones((IM_SIZE,), jnp.float32)
    tp['bn2_b'] = jnp.zeros((IM_SIZE,), jnp.float32)
    tp['fc2_w'] = uni(ks[3], IM_SIZE, (IM_SIZE, IM_SIZE))
    tp['fc2_b'] = uni(ks[4], IM_SIZE, (IM_SIZE,))
    tp['bn3_g'] = jnp.ones((IM_SIZE,), jnp.float32)
    tp['bn3_b'] = jnp.zeros((IM_SIZE,), jnp.float32)
    tp['fc3_w'] = uni(ks[5], IM_SIZE, (CLASSES, IM_SIZE))
    tp['fc3_b'] = uni(ks[6], IM_SIZE, (CLASSES,))
    return tp


# ---- Pack PyTorch-layout params into ONE lane-dense kernel slab (offline) -----
def pack_params(tp):
    L = APPEND
    w = np.asarray(tp['w_conv'])                        # (C_out, C_in, K)

    slab = np.zeros((TOTAL_ROWS, PAD), np.float32)      # zero padding everywhere

    # Conv as one matmul: y[b, t*C_out + o] = sum_{c,k} x[b, c*L + K*t + k] * w[o, c, k]
    for t in range(T_OUT):
        for c in range(IN_CHANNELS):
            for k in range(KERNEL_A):
                slab[W_CONV_OFF + c * L + KERNEL_A * t + k,
                     t * CONV_FEATURES:(t + 1) * CONV_FEATURES] = w[:, c, k]

    # Kernel feature order is (t*C_out + o); PyTorch Flatten order is (o*T + t).
    # perm[f_new] = old flatten index holding the same logical feature.
    perm = np.array([(f % CONV_FEATURES) * T_OUT + f // CONV_FEATURES
                     for f in range(CONV_OUT_DIM)], dtype=np.int64)

    # FC weights, transposed to (in, out) and zero-padded to (128, 128).
    slab[FC1_OFF:FC1_OFF + CONV_OUT_DIM, :IM_SIZE] = np.asarray(tp['fc1_w']).T[perm, :]
    slab[FC2_OFF:FC2_OFF + IM_SIZE, :IM_SIZE]      = np.asarray(tp['fc2_w']).T
    slab[FC3_OFF:FC3_OFF + IM_SIZE, :CLASSES]      = np.asarray(tp['fc3_w']).T

    # Packed vectors (padded lanes stay exactly 0 -> padded features stay 0).
    slab[PVEC_OFF + ROW_BN1_G, :CONV_OUT_DIM] = np.asarray(tp['bn1_g'])[perm]
    slab[PVEC_OFF + ROW_BN1_B, :CONV_OUT_DIM] = np.asarray(tp['bn1_b'])[perm]
    slab[PVEC_OFF + ROW_FC1_B, :IM_SIZE]      = np.asarray(tp['fc1_b'])
    slab[PVEC_OFF + ROW_BN2_G, :IM_SIZE]      = np.asarray(tp['bn2_g'])
    slab[PVEC_OFF + ROW_BN2_B, :IM_SIZE]      = np.asarray(tp['bn2_b'])
    slab[PVEC_OFF + ROW_FC2_B, :IM_SIZE]      = np.asarray(tp['fc2_b'])
    slab[PVEC_OFF + ROW_BN3_G, :IM_SIZE]      = np.asarray(tp['bn3_g'])
    slab[PVEC_OFF + ROW_BN3_B, :IM_SIZE]      = np.asarray(tp['bn3_b'])
    slab[PVEC_OFF + ROW_FC3_B, :CLASSES]      = np.asarray(tp['fc3_b'])

    return jnp.asarray(slab)                            # (544, 128) f32, ~278 KB


# ---- Pure-JAX reference: original PyTorch semantics on PyTorch-layout params --
def reference_forward(x, tp):
    B, C, L = x.shape
    patches = x.reshape(B, C, T_OUT, KERNEL_A)                       # window t = x[:, :, 3t:3t+3]
    y = jnp.einsum('bctk,ock->bot', patches, tp['w_conv'])           # Conv1d, no bias
    feat = y.reshape(B, CONV_FEATURES * T_OUT)                       # nn.Flatten: index = o*T + t

    def bn(h, g, b):
        m = h.mean(0, keepdims=True)
        v = ((h - m) ** 2).mean(0, keepdims=True)
        return (h - m) / jnp.sqrt(v + BN_EPS) * g + b

    h = jax.nn.relu(bn(feat, tp['bn1_g'], tp['bn1_b']))
    h = jax.nn.relu(bn(h @ tp['fc1_w'].T + tp['fc1_b'], tp['bn2_g'], tp['bn2_b']))
    h = jax.nn.relu(bn(h @ tp['fc2_w'].T + tp['fc2_b'], tp['bn3_g'], tp['bn3_b']))
    return h @ tp['fc3_w'].T + tp['fc3_b']


if __name__ == "__main__":
    key = jax.random.PRNGKey(0)
    pkey, xkey = jax.random.split(key)

    torch_params = init_torch_params(pkey)
    params_slab = pack_params(torch_params)
    x = jax.random.normal(xkey, (BATCH, IN_CHANNELS, APPEND), jnp.float32)

    out = jax.block_until_ready(conv1dnet_forward(x, params_slab))
    assert out.shape == (BATCH, CLASSES)

    ref = reference_forward(x, torch_params)
    np.testing.assert_allclose(np.asarray(out), np.asarray(ref), rtol=1e-4, atol=1e-4)

    print("KERNEL_OK")
</pallas_src>

<mosaic_0001>
module attributes {stable_mosaic.version = 11 : i64} {
  func.func @fused_kernel(%arg0: memref<4x144xf32, #tpu.memory_space<vmem>>, %arg1: memref<544x128xf32, #tpu.memory_space<vmem>>, %arg2: memref<4x128xf32, #tpu.memory_space<vmem>>) attributes {dimension_semantics = [], scalar_prefetch = 0 : i64, scratch_operands = 0 : i64, tpu.core_type = #tpu.core_type<tc>} {
    %c528 = arith.constant 528 : index
    %c0 = arith.constant 0 : index
    %0 = vector.load %arg1[%c528, %c0] : memref<544x128xf32, #tpu.memory_space<vmem>>, vector<1x128xf32>
    %c529 = arith.constant 529 : index
    %c0_0 = arith.constant 0 : index
    %1 = vector.load %arg1[%c529, %c0_0] : memref<544x128xf32, #tpu.memory_space<vmem>>, vector<1x128xf32>
    %c530 = arith.constant 530 : index
    %c0_1 = arith.constant 0 : index
    %2 = vector.load %arg1[%c530, %c0_1] : memref<544x128xf32, #tpu.memory_space<vmem>>, vector<1x128xf32>
    %c531 = arith.constant 531 : index
    %c0_2 = arith.constant 0 : index
    %3 = vector.load %arg1[%c531, %c0_2] : memref<544x128xf32, #tpu.memory_space<vmem>>, vector<1x128xf32>
    %c532 = arith.constant 532 : index
    %c0_3 = arith.constant 0 : index
    %4 = vector.load %arg1[%c532, %c0_3] : memref<544x128xf32, #tpu.memory_space<vmem>>, vector<1x128xf32>
    %c533 = arith.constant 533 : index
    %c0_4 = arith.constant 0 : index
    %5 = vector.load %arg1[%c533, %c0_4] : memref<544x128xf32, #tpu.memory_space<vmem>>, vector<1x128xf32>
    %c534 = arith.constant 534 : index
    %c0_5 = arith.constant 0 : index
    %6 = vector.load %arg1[%c534, %c0_5] : memref<544x128xf32, #tpu.memory_space<vmem>>, vector<1x128xf32>
    %c535 = arith.constant 535 : index
    %c0_6 = arith.constant 0 : index
    %7 = vector.load %arg1[%c535, %c0_6] : memref<544x128xf32, #tpu.memory_space<vmem>>, vector<1x128xf32>
    %c536 = arith.constant 536 : index
    %c0_7 = arith.constant 0 : index
    %8 = vector.load %arg1[%c536, %c0_7] : memref<544x128xf32, #tpu.memory_space<vmem>>, vector<1x128xf32>
    %c0_8 = arith.constant 0 : index
    %c0_9 = arith.constant 0 : index
    %9 = vector.load %arg1[%c0_8, %c0_9] : memref<544x128xf32, #tpu.memory_space<vmem>>, vector<144x128xf32>
    %c144 = arith.constant 144 : index
    %c0_10 = arith.constant 0 : index
    %10 = vector.load %arg1[%c144, %c0_10] : memref<544x128xf32, #tpu.memory_space<vmem>>, vector<128x128xf32>
    %c272 = arith.constant 272 : index
    %c0_11 = arith.constant 0 : index
    %11 = vector.load %arg1[%c272, %c0_11] : memref<544x128xf32, #tpu.memory_space<vmem>>, vector<128x128xf32>
    %c400 = arith.constant 400 : index
    %c0_12 = arith.constant 0 : index
    %12 = vector.load %arg1[%c400, %c0_12] : memref<544x128xf32, #tpu.memory_space<vmem>>, vector<128x128xf32>
    %c0_13 = arith.constant 0 : index
    %c0_14 = arith.constant 0 : index
    %13 = vector.load %arg0[%c0_13, %c0_14] : memref<4x144xf32, #tpu.memory_space<vmem>>, vector<4x144xf32>
    %cst = arith.constant dense<0.000000e+00> : vector<4x128xf32>
    %14 = tpu.matmul %13, %9, %cst {dimension_numbers = #tpu.dot_dimension_numbers<[1], [0], [0], [1], [0, 0, 1, 1], [], []>} : vector<4x144xf32>, vector<144x128xf32>, vector<4x128xf32> -> vector<4x128xf32>
    %cst_15 = arith.constant dense<0.000000e+00> : vector<128xf32>
    %15 = vector.multi_reduction <add>, %14, %cst_15 [0] : vector<4x128xf32> to vector<128xf32>
    %16 = vector.shape_cast %15 : vector<128xf32> to vector<1x128xf32>
    %cst_16 = arith.constant 4.000000e+00 : f32
    %17 = vector.broadcast %cst_16 : f32 to vector<1x128xf32>
    %18 = arith.divf %16, %17 : vector<1x128xf32>
    %19 = vector.broadcast %18 : vector<1x128xf32> to vector<4x128xf32>
    %20 = arith.subf %14, %19 : vector<4x128xf32>
    %21 = arith.mulf %20, %20 : vector<4x128xf32>
    %cst_17 = arith.constant dense<0.000000e+00> : vector<128xf32>
    %22 = vector.multi_reduction <add>, %21, %cst_17 [0] : vector<4x128xf32> to vector<128xf32>
    %23 = vector.shape_cast %22 : vector<128xf32> to vector<1x128xf32>
    %cst_18 = arith.constant 4.000000e+00 : f32
    %24 = vector.broadcast %cst_18 : f32 to vector<1x128xf32>
    %25 = arith.divf %23, %24 : vector<1x128xf32>
    %cst_19 = arith.constant 9.99999974E-6 : f32
    %26 = vector.broadcast %cst_19 : f32 to vector<1x128xf32>
    %27 = arith.addf %25, %26 : vector<1x128xf32>
    %28 = math.rsqrt %27 : vector<1x128xf32>
    %29 = vector.broadcast %28 : vector<1x128xf32> to vector<4x128xf32>
    %30 = arith.mulf %20, %29 : vector<4x128xf32>
    %31 = vector.broadcast %0 : vector<1x128xf32> to vector<4x128xf32>
    %32 = arith.mulf %30, %31 : vector<4x128xf32>
    %33 = vector.broadcast %1 : vector<1x128xf32> to vector<4x128xf32>
    %34 = arith.addf %32, %33 : vector<4x128xf32>
    %cst_20 = arith.constant 0.000000e+00 : f32
    %35 = vector.broadcast %cst_20 : f32 to vector<4x128xf32>
    %36 = arith.maximumf %34, %35 : vector<4x128xf32>
    %cst_21 = arith.constant dense<0.000000e+00> : vector<4x128xf32>
    %37 = tpu.matmul %36, %10, %cst_21 {dimension_numbers = #tpu.dot_dimension_numbers<[1], [0], [0], [1], [0, 0, 1, 1], [], []>} : vector<4x128xf32>, vector<128x128xf32>, vector<4x128xf32> -> vector<4x128xf32>
    %38 = vector.broadcast %2 : vector<1x128xf32> to vector<4x128xf32>
    %39 = arith.addf %37, %38 : vector<4x128xf32>
    %cst_22 = arith.constant dense<0.000000e+00> : vector<128xf32>
    %40 = vector.multi_reduction <add>, %39, %cst_22 [0] : vector<4x128xf32> to vector<128xf32>
    %41 = vector.shape_cast %40 : vector<128xf32> to vector<1x128xf32>
    %cst_23 = arith.constant 4.000000e+00 : f32
    %42 = vector.broadcast %cst_23 : f32 to vector<1x128xf32>
    %43 = arith.divf %41, %42 : vector<1x128xf32>
    %44 = vector.broadcast %43 : vector<1x128xf32> to vector<4x128xf32>
    %45 = arith.subf %39, %44 : vector<4x128xf32>
    %46 = arith.mulf %45, %45 : vector<4x128xf32>
    %cst_24 = arith.constant dense<0.000000e+00> : vector<128xf32>
    %47 = vector.multi_reduction <add>, %46, %cst_24 [0] : vector<4x128xf32> to vector<128xf32>
    %48 = vector.shape_cast %47 : vector<128xf32> to vector<1x128xf32>
    %cst_25 = arith.constant 4.000000e+00 : f32
    %49 = vector.broadcast %cst_25 : f32 to vector<1x128xf32>
    %50 = arith.divf %48, %49 : vector<1x128xf32>
    %cst_26 = arith.constant 9.99999974E-6 : f32
    %51 = vector.broadcast %cst_26 : f32 to vector<1x128xf32>
    %52 = arith.addf %50, %51 : vector<1x128xf32>
    %53 = math.rsqrt %52 : vector<1x128xf32>
    %54 = vector.broadcast %53 : vector<1x128xf32> to vector<4x128xf32>
    %55 = arith.mulf %45, %54 : vector<4x128xf32>
    %56 = vector.broadcast %3 : vector<1x128xf32> to vector<4x128xf32>
    %57 = arith.mulf %55, %56 : vector<4x128xf32>
    %58 = vector.broadcast %4 : vector<1x128xf32> to vector<4x128xf32>
    %59 = arith.addf %57, %58 : vector<4x128xf32>
    %cst_27 = arith.constant 0.000000e+00 : f32
    %60 = vector.broadcast %cst_27 : f32 to vector<4x128xf32>
    %61 = arith.maximumf %59, %60 : vector<4x128xf32>
    %cst_28 = arith.constant dense<0.000000e+00> : vector<4x128xf32>
    %62 = tpu.matmul %61, %11, %cst_28 {dimension_numbers = #tpu.dot_dimension_numbers<[1], [0], [0], [1], [0, 0, 1, 1], [], []>} : vector<4x128xf32>, vector<128x128xf32>, vector<4x128xf32> -> vector<4x128xf32>
    %63 = vector.broadcast %5 : vector<1x128xf32> to vector<4x128xf32>
    %64 = arith.addf %62, %63 : vector<4x128xf32>
    %cst_29 = arith.constant dense<0.000000e+00> : vector<128xf32>
    %65 = vector.multi_reduction <add>, %64, %cst_29 [0] : vector<4x128xf32> to vector<128xf32>
    %66 = vector.shape_cast %65 : vector<128xf32> to vector<1x128xf32>
    %cst_30 = arith.constant 4.000000e+00 : f32
    %67 = vector.broadcast %cst_30 : f32 to vector<1x128xf32>
    %68 = arith.divf %66, %67 : vector<1x128xf32>
    %69 = vector.broadcast %68 : vector<1x128xf32> to vector<4x128xf32>
    %70 = arith.subf %64, %69 : vector<4x128xf32>
    %71 = arith.mulf %70, %70 : vector<4x128xf32>
    %cst_31 = arith.constant dense<0.000000e+00> : vector<128xf32>
    %72 = vector.multi_reduction <add>, %71, %cst_31 [0] : vector<4x128xf32> to vector<128xf32>
    %73 = vector.shape_cast %72 : vector<128xf32> to vector<1x128xf32>
    %cst_32 = arith.constant 4.000000e+00 : f32
    %74 = vector.broadcast %cst_32 : f32 to vector<1x128xf32>
    %75 = arith.divf %73, %74 : vector<1x128xf32>
    %cst_33 = arith.constant 9.99999974E-6 : f32
    %76 = vector.broadcast %cst_33 : f32 to vector<1x128xf32>
    %77 = arith.addf %75, %76 : vector<1x128xf32>
    %78 = math.rsqrt %77 : vector<1x128xf32>
    %79 = vector.broadcast %78 : vector<1x128xf32> to vector<4x128xf32>
    %80 = arith.mulf %70, %79 : vector<4x128xf32>
    %81 = vector.broadcast %6 : vector<1x128xf32> to vector<4x128xf32>
    %82 = arith.mulf %80, %81 : vector<4x128xf32>
    %83 = vector.broadcast %7 : vector<1x128xf32> to vector<4x128xf32>
    %84 = arith.addf %82, %83 : vector<4x128xf32>
    %cst_34 = arith.constant 0.000000e+00 : f32
    %85 = vector.broadcast %cst_34 : f32 to vector<4x128xf32>
    %86 = arith.maximumf %84, %85 : vector<4x128xf32>
    %cst_35 = arith.constant dense<0.000000e+00> : vector<4x128xf32>
    %87 = tpu.matmul %86, %12, %cst_35 {dimension_numbers = #tpu.dot_dimension_numbers<[1], [0], [0], [1], [0, 0, 1, 1], [], []>} : vector<4x128xf32>, vector<128x128xf32>, vector<4x128xf32> -> vector<4x128xf32>
    %88 = vector.broadcast %8 : vector<1x128xf32> to vector<4x128xf32>
    %89 = arith.addf %87, %88 : vector<4x128xf32>
    %c0_36 = arith.constant 0 : index
    %c0_37 = arith.constant 0 : index
    %90 = vector.load %arg2[%c0_36, %c0_37] : memref<4x128xf32, #tpu.memory_space<vmem>>, vector<4x128xf32>
    tpu.vector_store %arg2[%c0_36, %c0_37], %89 {strides = array<i32>} : memref<4x128xf32, #tpu.memory_space<vmem>>, vector<4x128xf32>,
    return
  }
}

</mosaic_0001>

<llo_original>
// kernel: conv1dnet_forward.1
$region0: #{conv1dnet_forward.1}
  #allocation0 [shape = 'u32[]', space=smem, size = 0x4, offset = 0x4, fixed_abs, tag = 'smem constant byte address 0x4 - core index']
  #allocation1 [shape = 'u32[144,128]{1,0:T(1,128)}', space=vmem, size = 0x12000, scoped, tag = 'internal scratch']
  %s0 = inlined_call_operand.vmem [shape: f32[4,144], index: 0, kind: input, shape index: {}]
  %s1 = inlined_call_operand.hbm [shape: f32[544,128], index: 1, kind: input, shape index: {}]
  %s2 = inlined_call_operand.hbm [shape: f32[4,128], index: 2, kind: output, shape index: {}]
  %s3 = sld [smem:[#allocation0]]
  $region22: #{conv1dnet_forward.1} parent=0
    _
  %s5 = ssub.s32 1, %s3
  %s6 = scalar_select 0, %s5, %s3
  $region1: #{conv1dnet_forward.1} parent=0
    #allocation2 [shape = 'u8[278528]{0}', space=vmem, size = 0x44000, scoped, tag = 'input window, operand 1, single buffered']
    #allocation3 [shape = 's32[1]{0}', space=sflag, size = 0x4, scoped, tag = 'scoped memory for conv1dnet_forward.1']
    #allocation4 [shape = 's32[1]{0}', space=sflag, size = 0x4, scoped, tag = 'scoped memory for conv1dnet_forward.1']
    #allocation5 [shape = 'u8[2048]{0}', space=vmem, size = 0x800, scoped, tag = 'output window, operand 0, single buffered']
    %7 = vsyncpa [#allocation3], 0
    %8 = vsyncpa [#allocation4], 0
    // Predicated region
    $region2: #{conv1dnet_forward.1} parent=1 // pred_check
      _
    $region3: #{conv1dnet_forward.1} parent=1 // pred_check_branch
      %10 = sbr.rel (0) target = $region5
    $region4: #{conv1dnet_forward.1} parent=1 // pred_region
      _
    $region5: #{conv1dnet_forward.1} parent=1 // pred_fallthru
      _
    // Predicated region
    $region6: #{conv1dnet_forward.1} parent=1 // pred_check
      _
    $region7: #{conv1dnet_forward.1} parent=1 // pred_check_branch
      %12 = sbr.rel (0) target = $region9
    $region8: #{conv1dnet_forward.1} parent=1 // pred_region
      %s14 = ssub.s32 8704, 8704
      %15 = vsyncadd [#allocation3], %s14
      %s16 = sshll.u32 [#allocation2], 4
      %s17 = int_to_ptr.vmem [resolvable:$true] %s16
      %22 = dma.hbm_to_vmem [thread:$0]  %s1, 8704, %s17, [#allocation3], 128, 128, 8
    $region9: #{conv1dnet_forward.1} parent=1 // pred_fallthru
      _
    // Predicated region
    $region10: #{conv1dnet_forward.1} parent=1 // pred_check
      _
    $region11: #{conv1dnet_forward.1} parent=1 // pred_check_branch
      %24 = sbr.rel (0) target = $region13
    $region12: #{conv1dnet_forward.1} parent=1 // pred_region
      %25 = dma.done [#allocation3], 8704
    $region13: #{conv1dnet_forward.1} parent=1 // pred_fallthru
      _
    %v26 = vld [vmem:[#allocation2 + $0x210] sm:$0x1]
    %v27 = vld [vmem:[#allocation2 + $0x211] sm:$0x1]
    %v28 = vld [vmem:[#allocation2 + $0x212] sm:$0x1]
    %v29 = vld [vmem:[#allocation2 + $0x213] sm:$0x1]
    %v30 = vld [vmem:[#allocation2 + $0x214] sm:$0x1]
    %v31 = vld [vmem:[#allocation2 + $0x215] sm:$0x1]
    %v32 = vld [vmem:[#allocation2 + $0x216] sm:$0x1]
    %v33 = vld [vmem:[#allocation2 + $0x217] sm:$0x1]
    %v34 = vld [vmem:[#allocation2 + $0x218] sm:$0x1]
    %v35 = vld [vmem:[#allocation2] sm:$0xff]
    %v36 = vld [vmem:[#allocation2 + $0x8] sm:$0xff]
    %v37 = vld [vmem:[#allocation2 + $0x10] sm:$0xff]
    %v38 = vld [vmem:[#allocation2 + $0x18] sm:$0xff]
    %v39 = vld [vmem:[#allocation2 + $0x20] sm:$0xff]
    %v40 = vld [vmem:[#allocation2 + $0x28] sm:$0xff]
    %v41 = vld [vmem:[#allocation2 + $0x30] sm:$0xff]
    %v42 = vld [vmem:[#allocation2 + $0x38] sm:$0xff]
    %v43 = vld [vmem:[#allocation2 + $0x40] sm:$0xff]
    %v44 = vld [vmem:[#allocation2 + $0x48] sm:$0xff]
    %v45 = vld [vmem:[#allocation2 + $0x50] sm:$0xff]
    %v46 = vld [vmem:[#allocation2 + $0x58] sm:$0xff]
    %v47 = vld [vmem:[#allocation2 + $0x60] sm:$0xff]
    %v48 = vld [vmem:[#allocation2 + $0x68] sm:$0xff]
    %v49 = vld [vmem:[#allocation2 + $0x70] sm:$0xff]
    %v50 = vld [vmem:[#allocation2 + $0x78] sm:$0xff]
    %v51 = vld [vmem:[#allocation2 + $0x80] sm:$0xff]
    %v52 = vld [vmem:[#allocation2 + $0x88] sm:$0xff]
    %v53 = vld [vmem:[#allocation2 + $0x90] sm:$0xff]
    %v54 = vld [vmem:[#allocation2 + $0x98] sm:$0xff]
    %v55 = vld [vmem:[#allocation2 + $0xa0] sm:$0xff]
    %v56 = vld [vmem:[#allocation2 + $0xa8] sm:$0xff]
    %v57 = vld [vmem:[#allocation2 + $0xb0] sm:$0xff]
    %v58 = vld [vmem:[#allocation2 + $0xb8] sm:$0xff]
    %v59 = vld [vmem:[#allocation2 + $0xc0] sm:$0xff]
    %v60 = vld [vmem:[#allocation2 + $0xc8] sm:$0xff]
    %v61 = vld [vmem:[#allocation2 + $0xd0] sm:$0xff]
    %v62 = vld [vmem:[#allocation2 + $0xd8] sm:$0xff]
    %v63 = vld [vmem:[#allocation2 + $0xe0] sm:$0xff]
    %v64 = vld [vmem:[#allocation2 + $0xe8] sm:$0xff]
    %v65 = vld [vmem:[#allocation2 + $0xf0] sm:$0xff]
    %v66 = vld [vmem:[#allocation2 + $0xf8] sm:$0xff]
    %v67 = vld [vmem:[#allocation2 + $0x100] sm:$0xff]
    %v68 = vld [vmem:[#allocation2 + $0x108] sm:$0xff]
    %v69 = vld [vmem:[#allocation2 + $0x110] sm:$0xff]
    %v70 = vld [vmem:[#allocation2 + $0x118] sm:$0xff]
    %v71 = vld [vmem:[#allocation2 + $0x120] sm:$0xff]
    %v72 = vld [vmem:[#allocation2 + $0x128] sm:$0xff]
    %v73 = vld [vmem:[#allocation2 + $0x130] sm:$0xff]
    %v74 = vld [vmem:[#allocation2 + $0x138] sm:$0xff]
    %v75 = vld [vmem:[#allocation2 + $0x140] sm:$0xff]
    %v76 = vld [vmem:[#allocation2 + $0x148] sm:$0xff]
    %v77 = vld [vmem:[#allocation2 + $0x150] sm:$0xff]
    %v78 = vld [vmem:[#allocation2 + $0x158] sm:$0xff]
    %v79 = vld [vmem:[#allocation2 + $0x160] sm:$0xff]
    %v80 = vld [vmem:[#allocation2 + $0x168] sm:$0xff]
    %v81 = vld [vmem:[#allocation2 + $0x170] sm:$0xff]
    %v82 = vld [vmem:[#allocation2 + $0x178] sm:$0xff]
    %v83 = vld [vmem:[#allocation2 + $0x180] sm:$0xff]
    %v84 = vld [vmem:[#allocation2 + $0x188] sm:$0xff]
    %v85 = vld [vmem:[#allocation2 + $0x190] sm:$0xff]
    %v86 = vld [vmem:[#allocation2 + $0x198] sm:$0xff]
    %v87 = vld [vmem:[#allocation2 + $0x1a0] sm:$0xff]
    %v88 = vld [vmem:[#allocation2 + $0x1a8] sm:$0xff]
    %v89 = vld [vmem:[#allocation2 + $0x1b0] sm:$0xff]
    %v90 = vld [vmem:[#allocation2 + $0x1b8] sm:$0xff]
    %v91 = vld [vmem:[#allocation2 + $0x1c0] sm:$0xff]
    %v92 = vld [vmem:[#allocation2 + $0x1c8] sm:$0xff]
    %v93 = vld [vmem:[#allocation2 + $0x1d0] sm:$0xff]
    %v94 = vld [vmem:[#allocation2 + $0x1d8] sm:$0xff]
    %v95 = vld [vmem:[#allocation2 + $0x1e0] sm:$0xff]
    %v96 = vld [vmem:[#allocation2 + $0x1e8] sm:$0xff]
    %v97 = vld [vmem:[#allocation2 + $0x1f0] sm:$0xff]
    %v98 = vld [vmem:[#allocation2 + $0x1f8] sm:$0xff]
    %v99 = vld [vmem:[#allocation2 + $0x200] sm:$0xff]
    %v100 = vld [vmem:[#allocation2 + $0x208] sm:$0xff]
    %v101 = vld [vmem:[%s0] sm:$0xff]
    %v103 = vcombine.high %v101, %v101
    %vm104 = vcmask 130048
    %v105 = vsel %vm104, %v103, 0
    %107 = vmatprep.subr.mxu0 0.0
    %108 = vmatpush1.msra.mxu0 %v35
    %109 = vmatprep.subr.mxu0 0.0
    %110 = vmatpush1.msra.mxu0 %v36
    %111 = vmatprep.subr.mxu0 0.0
    %112 = vmatpush1.msra.mxu0 %v37
    %113 = vmatprep.subr.mxu0 0.0
    %114 = vmatpush1.msra.mxu0 %v38
    %115 = vmatprep.subr.mxu0 0.0
    %116 = vmatpush1.msra.mxu0 %v39
    %117 = vmatprep.subr.mxu0 0.0
    %118 = vmatpush1.msra.mxu0 %v40
    %119 = vmatprep.subr.mxu0 0.0
    %120 = vmatpush1.msra.mxu0 %v41
    %121 = vmatprep.subr.mxu0 0.0
    %122 = vmatpush1.msra.mxu0 %v42
    %123 = vmatprep.subr.mxu0 0.0
    %124 = vmatpush1.msra.mxu0 %v43
    %125 = vmatprep.subr.mxu0 0.0
    %126 = vmatpush1.msra.mxu0 %v44
    %127 = vmatprep.subr.mxu0 0.0
    %128 = vmatpush1.msra.mxu0 %v45
    %129 = vmatprep.subr.mxu0 0.0
    %130 = vmatpush1.msra.mxu0 %v46
    %131 = vmatprep.subr.mxu0 0.0
    %132 = vmatpush1.msra.mxu0 %v47
    %133 = vmatprep.subr.mxu0 0.0
    %134 = vmatpush1.msra.mxu0 %v48
    %135 = vmatprep.subr.mxu0 0.0
    %136 = vmatpush1.msra.mxu0 %v49
    %137 = vmatprep.subr.mxu0 0.0
    %138 = vmatpush1.msra.mxu0 %v50
    %139 = vmatprep.subr.mxu0 0.0
    %140 = vmatpush1.msra.mxu0 %v51
    %141 = vmatprep.subr.mxu0 0.0
    %142 = vmatpush1.msra.mxu0 %v52
    %143 = vmatprep.subr.mxu0 0.0
    %144 = vmatpush1.msra.mxu0 0.0
    %145 = vmatprep.subr.mxu0 0.0
    %146 = vmatpush1.msra.mxu0 0.0
    %147 = vmatprep.subr.mxu0 0.0
    %148 = vmatpush1.msra.mxu0 0.0
    %149 = vmatprep.subr.mxu0 0.0
    %150 = vmatpush1.msra.mxu0 0.0
    %151 = vmatprep.subr.mxu0 0.0
    %152 = vmatpush1.msra.mxu0 0.0
    %153 = vmatprep.subr.mxu0 0.0
    %154 = vmatpush1.msra.mxu0 0.0
    %155 = vmatprep.subr.mxu0 0.0
    %156 = vmatpush1.msra.mxu0 0.0
    %157 = vmatprep.subr.mxu0 0.0
    %158 = vmatpush1.msra.mxu0 0.0
    %159 = vmatprep.subr.mxu0 0.0
    %160 = vmatpush1.msra.mxu0 0.0
    %161 = vmatprep.subr.mxu0 0.0
    %162 = vmatpush1.msra.mxu0 0.0
    %163 = vmatprep.subr.mxu0 0.0
    %164 = vmatpush1.msra.mxu0 0.0
    %165 = vmatprep.subr.mxu0 0.0
    %166 = vmatpush1.msra.mxu0 0.0
    %167 = vmatprep.subr.mxu0 0.0
    %168 = vmatpush1.msra.mxu0 0.0
    %169 = vmatprep.subr.mxu0 0.0
    %170 = vmatpush1.msra.mxu0 0.0
    %171 = vmatprep.mubr.f32.mxu0 %v105
    %172 = vmatmul.mubr.f32.gmra.mrb[0].mxu0 %v101
    %v173 = vpop.f32.mrb[0].mxu0
    %v174 = vadd.f32 0.0, %v173
    %v175 = vpop.f32.mrb[0].mxu0
    %176 = vdwg.mxu0
    %vm177 = vcmask 1043456
    %v178 = vsel %vm177, %v174, 0.0
    %v179 = vrot.slane %v178, 4
    %v180 = vadd.f32 %v178, %v179
    %v181 = vrot.slane %v180, 2
    %v182 = vadd.f32 %v180, %v181
    %v183 = vrot.slane %v182, 1
    %v184 = vadd.f32 %v182, %v183
    %v185 = vrcp.pop 4.0
    %v186 = vmul.f32 %v184, %v185
    %v187 = vsub.f32 %v174, %v186
    %v188 = vmul.f32 %v187, %v187
    %v189 = vsel %vm177, %v188, 0.0
    %v190 = vrot.slane %v189, 4
    %v191 = vadd.f32 %v189, %v190
    %v192 = vrot.slane %v191, 2
    %v193 = vadd.f32 %v191, %v192
    %v194 = vrot.slane %v193, 1
    %v195 = vadd.f32 %v193, %v194
    %v196 = vmul.f32 %v195, %v185
    %v197 = vadd.f32 %v196, 1e-05
    %v198 = vrsqrt.pop %v197
    %v199 = vmul.f32 %v187, %v198
    %v200 = vlaneseq
    %v201 = vshrl.u32 %v200, 7
    %v202 = vsub.s32 0, %v201
    %v203 = vrot.slane %v26, %v202
    %v204 = vmul.f32 %v199, %v203
    %v205 = vlaneseq
    %v206 = vshrl.u32 %v205, 7
    %v207 = vsub.s32 0, %v206
    %v208 = vrot.slane %v27, %v207
    %v209 = vadd.f32 %v204, %v208
    %v210 = vmax.f32 %v209, 0.0
    %v211 = vlaneseq
    %v212 = vshrl.u32 %v211, 7
    %v213 = vsub.s32 0, %v212
    %v214 = vrot.slane %v28, %v213
    %215 = vmatprep.subr.mxu0 0.0
    %216 = vmatpush1.msra.mxu0 %v53
    %217 = vmatprep.subr.mxu0 0.0
    %218 = vmatpush1.msra.mxu0 %v54
    %219 = vmatprep.subr.mxu0 0.0
    %220 = vmatpush1.msra.mxu0 %v55
    %221 = vmatprep.subr.mxu0 0.0
    %222 = vmatpush1.msra.mxu0 %v56
    %223 = vmatprep.subr.mxu0 0.0
    %224 = vmatpush1.msra.mxu0 %v57
    %225 = vmatprep.subr.mxu0 0.0
    %226 = vmatpush1.msra.mxu0 %v58
    %227 = vmatprep.subr.mxu0 0.0
    %228 = vmatpush1.msra.mxu0 %v59
    %229 = vmatprep.subr.mxu0 0.0
    %230 = vmatpush1.msra.mxu0 %v60
    %231 = vmatprep.subr.mxu0 0.0
    %232 = vmatpush1.msra.mxu0 %v61
    %233 = vmatprep.subr.mxu0 0.0
    %234 = vmatpush1.msra.mxu0 %v62
    %235 = vmatprep.subr.mxu0 0.0
    %236 = vmatpush1.msra.mxu0 %v63
    %237 = vmatprep.subr.mxu0 0.0
    %238 = vmatpush1.msra.mxu0 %v64
    %239 = vmatprep.subr.mxu0 0.0
    %240 = vmatpush1.msra.mxu0 %v65
    %241 = vmatprep.subr.mxu0 0.0
    %242 = vmatpush1.msra.mxu0 %v66
    %243 = vmatprep.subr.mxu0 0.0
    %244 = vmatpush1.msra.mxu0 %v67
    %245 = vmatprep.subr.mxu0 0.0
    %246 = vmatpush1.msra.mxu0 %v68
    %247 = vmatprep.subr.mxu0 0.0
    %248 = vmatpush1.msra.mxu0 0.0
    %249 = vmatprep.subr.mxu0 0.0
    %250 = vmatpush1.msra.mxu0 0.0
    %251 = vmatprep.subr.mxu0 0.0
    %252 = vmatpush1.msra.mxu0 0.0
    %253 = vmatprep.subr.mxu0 0.0
    %254 = vmatpush1.msra.mxu0 0.0
    %255 = vmatprep.subr.mxu0 0.0
    %256 = vmatpush1.msra.mxu0 0.0
    %257 = vmatprep.subr.mxu0 0.0
    %258 = vmatpush1.msra.mxu0 0.0
    %259 = vmatprep.subr.mxu0 0.0
    %260 = vmatpush1.msra.mxu0 0.0
    %261 = vmatprep.subr.mxu0 0.0
    %262 = vmatpush1.msra.mxu0 0.0
    %263 = vmatprep.subr.mxu0 0.0
    %264 = vmatpush1.msra.mxu0 0.0
    %265 = vmatprep.subr.mxu0 0.0
    %266 = vmatpush1.msra.mxu0 0.0
    %267 = vmatprep.subr.mxu0 0.0
    %268 = vmatpush1.msra.mxu0 0.0
    %269 = vmatprep.subr.mxu0 0.0
    %270 = vmatpush1.msra.mxu0 0.0
    %271 = vmatprep.subr.mxu0 0.0
    %272 = vmatpush1.msra.mxu0 0.0
    %273 = vmatprep.subr.mxu0 0.0
    %274 = vmatpush1.msra.mxu0 0.0
    %275 = vmatprep.subr.mxu0 0.0
    %276 = vmatpush1.msra.mxu0 0.0
    %277 = vmatprep.subr.mxu0 0.0
    %278 = vmatpush1.msra.mxu0 0.0
    %279 = vmatprep.mubr.f32.mxu0 0.0
    %280 = vmatmul.mubr.f32.gmra.mrb[0].mxu0 %v210
    %v281 = vpop.f32.mrb[0].mxu0
    %v282 = vadd.f32 %v214, %v281
    %v283 = vpop.f32.mrb[0].mxu0
    %284 = vdwg.mxu0
    %v285 = vsel %vm177, %v282, 0.0
    %v286 = vrot.slane %v285, 4
    %v287 = vadd.f32 %v285, %v286
    %v288 = vrot.slane %v287, 2
    %v289 = vadd.f32 %v287, %v288
    %v290 = vrot.slane %v289, 1
    %v291 = vadd.f32 %v289, %v290
    %v292 = vmul.f32 %v291, %v185
    %v293 = vsub.f32 %v282, %v292
    %v294 = vmul.f32 %v293, %v293
    %v295 = vsel %vm177, %v294, 0.0
    %v296 = vrot.slane %v295, 4
    %v297 = vadd.f32 %v295, %v296
    %v298 = vrot.slane %v297, 2
    %v299 = vadd.f32 %v297, %v298
    %v300 = vrot.slane %v299, 1
    %v301 = vadd.f32 %v299, %v300
    %v302 = vmul.f32 %v301, %v185
    %v303 = vadd.f32 %v302, 1e-05
    %v304 = vrsqrt.pop %v303
    %v305 = vmul.f32 %v293, %v304
    %v306 = vlaneseq
    %v307 = vshrl.u32 %v306, 7
    %v308 = vsub.s32 0, %v307
    %v309 = vrot.slane %v29, %v308
    %v310 = vmul.f32 %v305, %v309
    %v311 = vlaneseq
    %v312 = vshrl.u32 %v311, 7
    %v313 = vsub.s32 0, %v312
    %v314 = vrot.slane %v30, %v313
    %v315 = vadd.f32 %v310, %v314
    %v316 = vmax.f32 %v315, 0.0
    %v317 = vlaneseq
    %v318 = vshrl.u32 %v317, 7
    %v319 = vsub.s32 0, %v318
    %v320 = vrot.slane %v31, %v319
    %321 = vmatprep.subr.mxu0 0.0
    %322 = vmatpush1.msra.mxu0 %v69
    %323 = vmatprep.subr.mxu0 0.0
    %324 = vmatpush1.msra.mxu0 %v70
    %325 = vmatprep.subr.mxu0 0.0
    %326 = vmatpush1.msra.mxu0 %v71
    %327 = vmatprep.subr.mxu0 0.0
    %328 = vmatpush1.msra.mxu0 %v72
    %329 = vmatprep.subr.mxu0 0.0
    %330 = vmatpush1.msra.mxu0 %v73
    %331 = vmatprep.subr.mxu0 0.0
    %332 = vmatpush1.msra.mxu0 %v74
    %333 = vmatprep.subr.mxu0 0.0
    %334 = vmatpush1.msra.mxu0 %v75
    %335 = vmatprep.subr.mxu0 0.0
    %336 = vmatpush1.msra.mxu0 %v76
    %337 = vmatprep.subr.mxu0 0.0
    %338 = vmatpush1.msra.mxu0 %v77
    %339 = vmatprep.subr.mxu0 0.0
    %340 = vmatpush1.msra.mxu0 %v78
    %341 = vmatprep.subr.mxu0 0.0
    %342 = vmatpush1.msra.mxu0 %v79
    %343 = vmatprep.subr.mxu0 0.0
    %344 = vmatpush1.msra.mxu0 %v80
    %345 = vmatprep.subr.mxu0 0.0
    %346 = vmatpush1.msra.mxu0 %v81
    %347 = vmatprep.subr.mxu0 0.0
    %348 = vmatpush1.msra.mxu0 %v82
    %349 = vmatprep.subr.mxu0 0.0
    %350 = vmatpush1.msra.mxu0 %v83
    %351 = vmatprep.subr.mxu0 0.0
    %352 = vmatpush1.msra.mxu0 %v84
    %353 = vmatprep.subr.mxu0 0.0
    %354 = vmatpush1.msra.mxu0 0.0
    %355 = vmatprep.subr.mxu0 0.0
    %356 = vmatpush1.msra.mxu0 0.0
    %357 = vmatprep.subr.mxu0 0.0
    %358 = vmatpush1.msra.mxu0 0.0
    %359 = vmatprep.subr.mxu0 0.0
    %360 = vmatpush1.msra.mxu0 0.0
    %361 = vmatprep.subr.mxu0 0.0
    %362 = vmatpush1.msra.mxu0 0.0
    %363 = vmatprep.subr.mxu0 0.0
    %364 = vmatpush1.msra.mxu0 0.0
    %365 = vmatprep.subr.mxu0 0.0
    %366 = vmatpush1.msra.mxu0 0.0
    %367 = vmatprep.subr.mxu0 0.0
    %368 = vmatpush1.msra.mxu0 0.0
    %369 = vmatprep.subr.mxu0 0.0
    %370 = vmatpush1.msra.mxu0 0.0
    %371 = vmatprep.subr.mxu0 0.0
    %372 = vmatpush1.msra.mxu0 0.0
    %373 = vmatprep.subr.mxu0 0.0
    %374 = vmatpush1.msra.mxu0 0.0
    %375 = vmatprep.subr.mxu0 0.0
    %376 = vmatpush1.msra.mxu0 0.0
    %377 = vmatprep.subr.mxu0 0.0
    %378 = vmatpush1.msra.mxu0 0.0
    %379 = vmatprep.subr.mxu0 0.0
    %380 = vmatpush1.msra.mxu0 0.0
    %381 = vmatprep.subr.mxu0 0.0
    %382 = vmatpush1.msra.mxu0 0.0
    %383 = vmatprep.subr.mxu0 0.0
    %384 = vmatpush1.msra.mxu0 0.0
    %385 = vmatprep.mubr.f32.mxu0 0.0
    %386 = vmatmul.mubr.f32.gmra.mrb[0].mxu0 %v316
    %v387 = vpop.f32.mrb[0].mxu0
    %v388 = vadd.f32 %v320, %v387
    %v389 = vpop.f32.mrb[0].mxu0
    %390 = vdwg.mxu0
    %v391 = vsel %vm177, %v388, 0.0
    %v392 = vrot.slane %v391, 4
    %v393 = vadd.f32 %v391, %v392
    %v394 = vrot.slane %v393, 2
    %v395 = vadd.f32 %v393, %v394
    %v396 = vrot.slane %v395, 1
    %v397 = vadd.f32 %v395, %v396
    %v398 = vmul.f32 %v397, %v185
    %v399 = vsub.f32 %v388, %v398
    %v400 = vmul.f32 %v399, %v399
    %v401 = vsel %vm177, %v400, 0.0
    %v402 = vrot.slane %v401, 4
    %v403 = vadd.f32 %v401, %v402
    %v404 = vrot.slane %v403, 2
    %v405 = vadd.f32 %v403, %v404
    %v406 = vrot.slane %v405, 1
    %v407 = vadd.f32 %v405, %v406
    %v408 = vmul.f32 %v407, %v185
    %v409 = vadd.f32 %v408, 1e-05
    %v410 = vrsqrt.pop %v409
    %v411 = vmul.f32 %v399, %v410
    %v412 = vlaneseq
    %v413 = vshrl.u32 %v412, 7
    %v414 = vsub.s32 0, %v413
    %v415 = vrot.slane %v32, %v414
    %v416 = vmul.f32 %v411, %v415
    %v417 = vlaneseq
    %v418 = vshrl.u32 %v417, 7
    %v419 = vsub.s32 0, %v418
    %v420 = vrot.slane %v33, %v419
    %v421 = vadd.f32 %v416, %v420
    %v422 = vmax.f32 %v421, 0.0
    %v423 = vlaneseq
    %v424 = vshrl.u32 %v423, 7
    %v425 = vsub.s32 0, %v424
    %v426 = vrot.slane %v34, %v425
    %427 = vmatprep.subr.mxu0 0.0
    %428 = vmatpush1.msra.mxu0 %v85
    %429 = vmatprep.subr.mxu0 0.0
    %430 = vmatpush1.msra.mxu0 %v86
    %431 = vmatprep.subr.mxu0 0.0
    %432 = vmatpush1.msra.mxu0 %v87
    %433 = vmatprep.subr.mxu0 0.0
    %434 = vmatpush1.msra.mxu0 %v88
    %435 = vmatprep.subr.mxu0 0.0
    %436 = vmatpush1.msra.mxu0 %v89
    %437 = vmatprep.subr.mxu0 0.0
    %438 = vmatpush1.msra.mxu0 %v90
    %439 = vmatprep.subr.mxu0 0.0
    %440 = vmatpush1.msra.mxu0 %v91
    %441 = vmatprep.subr.mxu0 0.0
    %442 = vmatpush1.msra.mxu0 %v92
    %443 = vmatprep.subr.mxu0 0.0
    %444 = vmatpush1.msra.mxu0 %v93
    %445 = vmatprep.subr.mxu0 0.0
    %446 = vmatpush1.msra.mxu0 %v94
    %447 = vmatprep.subr.mxu0 0.0
    %448 = vmatpush1.msra.mxu0 %v95
    %449 = vmatprep.subr.mxu0 0.0
    %450 = vmatpush1.msra.mxu0 %v96
    %451 = vmatprep.subr.mxu0 0.0
    %452 = vmatpush1.msra.mxu0 %v97
    %453 = vmatprep.subr.mxu0 0.0
    %454 = vmatpush1.msra.mxu0 %v98
    %455 = vmatprep.subr.mxu0 0.0
    %456 = vmatpush1.msra.mxu0 %v99
    %457 = vmatprep.subr.mxu0 0.0
    %458 = vmatpush1.msra.mxu0 %v100
    %459 = vmatprep.subr.mxu0 0.0
    %460 = vmatpush1.msra.mxu0 0.0
    %461 = vmatprep.subr.mxu0 0.0
    %462 = vmatpush1.msra.mxu0 0.0
    %463 = vmatprep.subr.mxu0 0.0
    %464 = vmatpush1.msra.mxu0 0.0
    %465 = vmatprep.subr.mxu0 0.0
    %466 = vmatpush1.msra.mxu0 0.0
    %467 = vmatprep.subr.mxu0 0.0
    %468 = vmatpush1.msra.mxu0 0.0
    %469 = vmatprep.subr.mxu0 0.0
    %470 = vmatpush1.msra.mxu0 0.0
    %471 = vmatprep.subr.mxu0 0.0
    %472 = vmatpush1.msra.mxu0 0.0
    %473 = vmatprep.subr.mxu0 0.0
    %474 = vmatpush1.msra.mxu0 0.0
    %475 = vmatprep.subr.mxu0 0.0
    %476 = vmatpush1.msra.mxu0 0.0
    %477 = vmatprep.subr.mxu0 0.0
    %478 = vmatpush1.msra.mxu0 0.0
    %479 = vmatprep.subr.mxu0 0.0
    %480 = vmatpush1.msra.mxu0 0.0
    %481 = vmatprep.subr.mxu0 0.0
    %482 = vmatpush1.msra.mxu0 0.0
    %483 = vmatprep.subr.mxu0 0.0
    %484 = vmatpush1.msra.mxu0 0.0
    %485 = vmatprep.subr.mxu0 0.0
    %486 = vmatpush1.msra.mxu0 0.0
    %487 = vmatprep.subr.mxu0 0.0
    %488 = vmatpush1.msra.mxu0 0.0
    %489 = vmatprep.subr.mxu0 0.0
    %490 = vmatpush1.msra.mxu0 0.0
    %491 = vmatprep.mubr.f32.mxu0 0.0
    %492 = vmatmul.mubr.f32.gmra.mrb[0].mxu0 %v422
    %v493 = vpop.f32.mrb[0].mxu0
    %v494 = vadd.f32 %v426, %v493
    %v495 = vpop.f32.mrb[0].mxu0
    %496 = vdwg.mxu0
    %497 = vst [vmem:[#allocation5] sm:$0xf] %v494
    // Predicated region
    $region14: #{conv1dnet_forward.1} parent=1 // pred_check
      _
    $region15: #{conv1dnet_forward.1} parent=1 // pred_check_branch
      %499 = sbr.rel (0) target = $region17
    $region16: #{conv1dnet_forward.1} parent=1 // pred_region
      %s501 = ssub.s32 64, 64
      %502 = vsyncadd [#allocation4], %s501
      %s504 = sshll.u32 [#allocation5], 4
      %s505 = int_to_ptr.vmem [resolvable:$true] %s504
      %507 = dma.vmem_to_hbm [thread:$0]  %s505, 64, %s2, [#allocation4]
    $region17: #{conv1dnet_forward.1} parent=1 // pred_fallthru
      _
    // Predicated region
    $region18: #{conv1dnet_forward.1} parent=1 // pred_check
      _
    $region19: #{conv1dnet_forward.1} parent=1 // pred_check_branch
      %509 = sbr.rel (0) target = $region21
    $region20: #{conv1dnet_forward.1} parent=1 // pred_region
      %510 = dma.done [#allocation4], 64
    $region21: #{conv1dnet_forward.1} parent=1 // pred_fallthru
      _
    %511 = vsyncpa [#allocation3], 1
    %512 = vsyncpa [#allocation4], 1

</llo_original>
